<compile_context>
chip_gen: v5e
topology: v5e:2x2
jax: 0.10.0
libtpu: 0.0.40
codegen_flags: <defaults>
</compile_context>

<pallas_src>
import jax
import jax.numpy as jnp
from jax.experimental import pallas as pl
from jax.experimental.pallas import tpu as pltpu

_LANE = 128
_SUBLANE = 8
_SMALL_BATCH_MAX = 1024  # <= this: single full-array block, no padding, grid=(1,)


def _round_up(x, m):
    return -(-x // m) * m


def _fused_affine_kernel(x_ref, w_ref, b_ref, out_ref):
    # Single MXU pass per batch block: (block_b, 192) @ (192, n_pad) + (1, n_pad)
    out_ref[...] = (
        jnp.dot(x_ref[...], w_ref[...], preferred_element_type=jnp.float32)
        + b_ref[...]
    ).astype(out_ref.dtype)


def prepare_fused_params(params):
    """One-time (model-load) fusion of dense_layer_1 with the three heads.

    Returns (w_fused, b_fused, (G, A, E)) where
      w_fused: (192, n_pad), n_pad = round_up(G + A + E, 128)  (lane dense)
      b_fused: (1,   n_pad)
    so that  out = emb @ w_fused + b_fused  reproduces all three heads at once.
    Padded lanes carry zero weight / zero bias and are sliced off later.
    """
    w1, b1 = params["dense_layer_1"]   # (192,128), (1,128)
    wg, bg = params["gender_layer"]    # (128,G),   (1,G)
    wa, ba = params["age_layer"]       # (128,A),   (1,A)
    we, be = params["emotion_layer"]   # (128,E),   (1,E)
    G, A, E = wg.shape[1], wa.shape[1], we.shape[1]
    N = G + A + E

    w_heads = jnp.concatenate([wg, wa, we], axis=1)   # (128, N)
    b_heads = jnp.concatenate([bg, ba, be], axis=1)   # (1, N)
    w_fused = w1 @ w_heads                            # (192, N)
    b_fused = b1 @ w_heads + b_heads                  # (1, N)

    n_pad = _round_up(N, _LANE)
    w_fused = jnp.pad(w_fused, ((0, 0), (0, n_pad - N)))
    b_fused = jnp.pad(b_fused, ((0, 0), (0, n_pad - N)))
    return w_fused, b_fused, (G, A, E)


def wav2vec_classification_forward(embeddings, w_fused, b_fused, head_sizes):
    """Linear-head portion of Wav2Vec_classification.forward as one fused matmul."""
    B, D = embeddings.shape            # D == 192
    G, A, E = head_sizes
    n_pad = w_fused.shape[1]

    if B <= _SMALL_BATCH_MAX:
        # Full-array block: no batch padding needed (block == array dims is always
        # legal, even when B is not a multiple of 8), single grid step.
        block_b, b_pad, x = B, B, embeddings
    else:
        # Large batch: tile the batch axis into >= 2 blocks (so v7x megacore can
        # shard the "parallel" axis across both TensorCores), capped at 1024 rows.
        block_b = min(1024, _round_up(-(-B // 2), _SUBLANE))
        b_pad = _round_up(B, block_b)
        # Padded rows are zero -> padded outputs are just the bias, sliced off below.
        x = jnp.pad(embeddings, ((0, b_pad - B), (0, 0)))

    grid = (b_pad // block_b,)
    itemsize = 4  # f32
    cost = pl.CostEstimate(
        flops=2 * b_pad * D * n_pad,
        transcendentals=0,
        bytes_accessed=itemsize * (b_pad * D + D * n_pad + n_pad + b_pad * n_pad),
    )

    out = pl.pallas_call(
        _fused_affine_kernel,
        grid=grid,
        in_specs=[
            pl.BlockSpec((block_b, D), lambda i: (i, 0)),   # embeddings block
            pl.BlockSpec((D, n_pad), lambda i: (0, 0)),     # fused weight (resident)
            pl.BlockSpec((1, n_pad), lambda i: (0, 0)),     # fused bias (resident)
        ],
        out_specs=pl.BlockSpec((block_b, n_pad), lambda i: (i, 0)),
        out_shape=jax.ShapeDtypeStruct((b_pad, n_pad), jnp.float32),
        compiler_params=pltpu.CompilerParams(
            dimension_semantics=("parallel",)),
        cost_estimate=cost,
    )(x, w_fused, b_fused)

    gender = out[:B, :G]
    age = out[:B, G:G + A]
    emo = out[:B, G + A:G + A + E]
    # .squeeze() as in the torch forward (drops any size-1 dims, incl. batch at B==1)
    return jnp.squeeze(gender), jnp.squeeze(age), jnp.squeeze(emo)


def init_params(key, num_emo_class, num_gender_class, num_age_class):
    """Deterministic synthetic parameters matching the nn.Linear shapes."""
    ks = jax.random.split(key, 8)

    def linear(kw, kb, fan_in, fan_out):
        # weights stored as (in, out) so the math is x @ W + b (== torch x @ W.T + b)
        bound = 1.0 / jnp.sqrt(fan_in)
        w = jax.random.uniform(kw, (fan_in, fan_out), jnp.float32, -bound, bound)
        b = jax.random.uniform(kb, (1, fan_out), jnp.float32, -bound, bound)
        return w, b

    return {
        "dense_layer_1": linear(ks[0], ks[1], 192, 128),
        "gender_layer":  linear(ks[2], ks[3], 128, num_gender_class),
        "age_layer":     linear(ks[4], ks[5], 128, num_age_class),
        "emotion_layer": linear(ks[6], ks[7], 128, num_emo_class),
    }


if __name__ == "__main__":
    key = jax.random.PRNGKey(0)
    k_emb, k_par = jax.random.split(key)

    B = 8
    num_emo_class, num_gender_class, num_age_class = 6, 2, 4

    # Stand-in for ECAPA encode_batch output: (B, 192) embeddings.
    embeddings = jax.random.normal(k_emb, (B, 192), dtype=jnp.float32)
    params = init_params(k_par, num_emo_class, num_gender_class, num_age_class)

    # One-time parameter fusion (model-load time), NOT per forward call.
    w_fused, b_fused, head_sizes = prepare_fused_params(params)
    w_fused, b_fused = jax.block_until_ready((w_fused, b_fused))

    pred_gender, pred_age, pred_emo = wav2vec_classification_forward(
        embeddings, w_fused, b_fused, head_sizes)
    jax.block_until_ready((pred_gender, pred_age, pred_emo))

    # Pure-JAX two-stage reference check (unfused order).
    w1, b1 = params["dense_layer_1"]
    h_ref = embeddings @ w1 + b1
    for (w, b), got in [
        (params["gender_layer"], pred_gender),
        (params["age_layer"], pred_age),
        (params["emotion_layer"], pred_emo),
    ]:
        ref = jnp.squeeze(h_ref @ w + b)
        assert jnp.allclose(got, ref, atol=1e-4, rtol=1e-4), "mismatch vs reference"

    print("KERNEL_OK")
</pallas_src>

<mosaic_0001>
module attributes {stable_mosaic.version = 11 : i64} {
  func.func @_fused_affine_kernel(%arg0: i32, %arg1: memref<8x192xf32, #tpu.memory_space<vmem>>, %arg2: memref<192x128xf32, #tpu.memory_space<vmem>>, %arg3: memref<1x128xf32, #tpu.memory_space<vmem>>, %arg4: memref<8x128xf32, #tpu.memory_space<vmem>>) attributes {dimension_semantics = [#tpu.dimension_semantics<parallel>], iteration_bounds = array<i64: 1>, scalar_prefetch = 0 : i64, scratch_operands = 0 : i64, tpu.core_type = #tpu.core_type<tc>, window_params = [{transform_indices = @transform_0, window_bounds = array<i64: 8, 192>}, {pipeline_mode = #tpu.pipeline_mode<synchronous>, transform_indices = @transform_1, window_bounds = array<i64: 192, 128>}, {pipeline_mode = #tpu.pipeline_mode<synchronous>, transform_indices = @transform_2, window_bounds = array<i64: 1, 128>}, {transform_indices = @transform_3, window_bounds = array<i64: 8, 128>}]} {
    %c0 = arith.constant 0 : index
    %c0_0 = arith.constant 0 : index
    %0 = vector.load %arg1[%c0, %c0_0] : memref<8x192xf32, #tpu.memory_space<vmem>>, vector<8x192xf32>
    %c0_1 = arith.constant 0 : index
    %c0_2 = arith.constant 0 : index
    %1 = vector.load %arg2[%c0_1, %c0_2] : memref<192x128xf32, #tpu.memory_space<vmem>>, vector<192x128xf32>
    %cst = arith.constant dense<0.000000e+00> : vector<8x128xf32>
    %2 = tpu.matmul %0, %1, %cst {dimension_numbers = #tpu.dot_dimension_numbers<[1], [0], [0], [1], [0, 0, 1, 1], [], []>} : vector<8x192xf32>, vector<192x128xf32>, vector<8x128xf32> -> vector<8x128xf32>
    %c0_3 = arith.constant 0 : index
    %c0_4 = arith.constant 0 : index
    %3 = vector.load %arg3[%c0_3, %c0_4] : memref<1x128xf32, #tpu.memory_space<vmem>>, vector<1x128xf32>
    %4 = vector.broadcast %3 : vector<1x128xf32> to vector<8x128xf32>
    %5 = arith.addf %2, %4 : vector<8x128xf32>
    %c0_5 = arith.constant 0 : index
    %c0_6 = arith.constant 0 : index
    %6 = vector.load %arg4[%c0_5, %c0_6] : memref<8x128xf32, #tpu.memory_space<vmem>>, vector<8x128xf32>
    tpu.vector_store %arg4[%c0_5, %c0_6], %5 {strides = array<i32>} : memref<8x128xf32, #tpu.memory_space<vmem>>, vector<8x128xf32>,
    return
  }
  func.func @transform_0(%arg0: i32) -> (i32, i32) {
    %c0_i32 = arith.constant 0 : i32
    %c0_i32_0 = arith.constant 0 : i32
    return %arg0, %c0_i32 : i32, i32
  }
  func.func @transform_1(%arg0: i32) -> (i32, i32) {
    %c0_i32 = arith.constant 0 : i32
    %c0_i32_0 = arith.constant 0 : i32
    %c0_i32_1 = arith.constant 0 : i32
    return %c0_i32, %c0_i32_0 : i32, i32
  }
  func.func @transform_2(%arg0: i32) -> (i32, i32) {
    %c0_i32 = arith.constant 0 : i32
    %c0_i32_0 = arith.constant 0 : i32
    %c0_i32_1 = arith.constant 0 : i32
    return %c0_i32, %c0_i32_0 : i32, i32
  }
  func.func @transform_3(%arg0: i32) -> (i32, i32) {
    %c0_i32 = arith.constant 0 : i32
    %c0_i32_0 = arith.constant 0 : i32
    return %arg0, %c0_i32 : i32, i32
  }
}

</mosaic_0001>

<llo_original>
// kernel: tpu_custom_call.1
$region0: #{tpu_custom_call.1}
  #allocation0 [shape = 'u32[]', space=smem, size = 0x4, offset = 0x4, fixed_abs, tag = 'smem constant byte address 0x4 - core index']
  #allocation1 [shape = 'u32[72,128]{1,0:T(1,128)}', space=vmem, size = 0x9000, scoped, tag = 'internal scratch']
  %s0 = inlined_call_operand.hbm [shape: f32[8,192], index: 0, kind: input, shape index: {}]
  %s1 = inlined_call_operand.hbm [shape: f32[192,128], index: 1, kind: input, shape index: {}]
  %s2 = inlined_call_operand.vmem [shape: f32[1,128], index: 2, kind: input, shape index: {}]
  %s3 = inlined_call_operand.hbm [shape: f32[8,128], index: 3, kind: output, shape index: {}]
  %s4 = sld [smem:[#allocation0]]
  $region30: #{tpu_custom_call.1} parent=0
    _
  %s6 = ssub.s32 1, %s4
  %s7 = scalar_select 0, %s6, %s4
  $region1: #{tpu_custom_call.1} parent=0
    #allocation2 [shape = 'u8[8192]{0}', space=vmem, size = 0x2000, scoped, tag = 'input window, operand 0, single buffered']
    #allocation3 [shape = 's32[1]{0}', space=sflag, size = 0x4, scoped, tag = 'scoped memory for tpu_custom_call.1']
    #allocation4 [shape = 's32[1]{0}', space=sflag, size = 0x4, scoped, tag = 'scoped memory for tpu_custom_call.1']
    #allocation5 [shape = 'u8[98304]{0}', space=vmem, size = 0x18000, scoped, tag = 'input window, operand 1, single buffered']
    #allocation6 [shape = 's32[1]{0}', space=sflag, size = 0x4, scoped, tag = 'scoped memory for tpu_custom_call.1']
    #allocation7 [shape = 'u8[4096]{0}', space=vmem, size = 0x1000, scoped, tag = 'output window, operand 0, single buffered']
    %8 = vsyncpa [#allocation3], 0
    %9 = vsyncpa [#allocation6], 0
    %10 = vsyncpa [#allocation4], 0
    // Predicated region
    $region2: #{tpu_custom_call.1} parent=1 // pred_check
      _
    $region3: #{tpu_custom_call.1} parent=1 // pred_check_branch
      %12 = sbr.rel (0) target = $region5
    $region4: #{tpu_custom_call.1} parent=1 // pred_region
      %14 = vsyncadd [#allocation3], 0
      %s16 = sshll.u32 %s0, 4
      %s17 = int_to_ptr.hbm [resolvable:$true] %s16
      %s18 = sshll.u32 [#allocation2], 4
      %s19 = int_to_ptr.vmem [resolvable:$true] %s18
      %21 = dma.hbm_to_vmem [thread:$0]  %s17, 256, %s19, [#allocation3]
    $region5: #{tpu_custom_call.1} parent=1 // pred_fallthru
      _
    // Predicated region
    $region6: #{tpu_custom_call.1} parent=1 // pred_check
      _
    $region7: #{tpu_custom_call.1} parent=1 // pred_check_branch
      %23 = sbr.rel (0) target = $region9
    $region8: #{tpu_custom_call.1} parent=1 // pred_region
      %25 = vsyncadd [#allocation6], 0
      %s26 = sshll.u32 %s1, 4
      %s27 = int_to_ptr.hbm [resolvable:$true] %s26
      %s28 = sshll.u32 [#allocation5], 4
      %s29 = int_to_ptr.vmem [resolvable:$true] %s28
      %34 = dma.hbm_to_vmem [thread:$0]  %s27, 3072, %s29, [#allocation6], 128, 128, 8
    $region9: #{tpu_custom_call.1} parent=1 // pred_fallthru
      _
    // Predicated region
    $region10: #{tpu_custom_call.1} parent=1 // pred_check
      _
    $region11: #{tpu_custom_call.1} parent=1 // pred_check_branch
      %36 = sbr.rel (0) target = $region13
    $region12: #{tpu_custom_call.1} parent=1 // pred_region
      _
    $region13: #{tpu_custom_call.1} parent=1 // pred_fallthru
      _
    // Predicated region
    $region14: #{tpu_custom_call.1} parent=1 // pred_check
      _
    $region15: #{tpu_custom_call.1} parent=1 // pred_check_branch
      %38 = sbr.rel (0) target = $region17
    $region16: #{tpu_custom_call.1} parent=1 // pred_region
      %40 = dma.done [#allocation3], 256
    $region17: #{tpu_custom_call.1} parent=1 // pred_fallthru
      _
    // Predicated region
    $region18: #{tpu_custom_call.1} parent=1 // pred_check
      _
    $region19: #{tpu_custom_call.1} parent=1 // pred_check_branch
      %42 = sbr.rel (0) target = $region21
    $region20: #{tpu_custom_call.1} parent=1 // pred_region
      %44 = dma.done [#allocation6], 3072
    $region21: #{tpu_custom_call.1} parent=1 // pred_fallthru
      _
    %v45 = vld [vmem:[#allocation2] sm:$0xff]
    %v46 = vld [vmem:[#allocation2 + $0x8] sm:$0xff]
    %v47 = vld [vmem:[#allocation5] sm:$0xff]
    %v48 = vld [vmem:[#allocation5 + $0x8] sm:$0xff]
    %v49 = vld [vmem:[#allocation5 + $0x10] sm:$0xff]
    %v50 = vld [vmem:[#allocation5 + $0x18] sm:$0xff]
    %v51 = vld [vmem:[#allocation5 + $0x20] sm:$0xff]
    %v52 = vld [vmem:[#allocation5 + $0x28] sm:$0xff]
    %v53 = vld [vmem:[#allocation5 + $0x30] sm:$0xff]
    %v54 = vld [vmem:[#allocation5 + $0x38] sm:$0xff]
    %v55 = vld [vmem:[#allocation5 + $0x40] sm:$0xff]
    %v56 = vld [vmem:[#allocation5 + $0x48] sm:$0xff]
    %v57 = vld [vmem:[#allocation5 + $0x50] sm:$0xff]
    %v58 = vld [vmem:[#allocation5 + $0x58] sm:$0xff]
    %v59 = vld [vmem:[#allocation5 + $0x60] sm:$0xff]
    %v60 = vld [vmem:[#allocation5 + $0x68] sm:$0xff]
    %v61 = vld [vmem:[#allocation5 + $0x70] sm:$0xff]
    %v62 = vld [vmem:[#allocation5 + $0x78] sm:$0xff]
    %v63 = vld [vmem:[#allocation5 + $0x80] sm:$0xff]
    %v64 = vld [vmem:[#allocation5 + $0x88] sm:$0xff]
    %v65 = vld [vmem:[#allocation5 + $0x90] sm:$0xff]
    %v66 = vld [vmem:[#allocation5 + $0x98] sm:$0xff]
    %v67 = vld [vmem:[#allocation5 + $0xa0] sm:$0xff]
    %v68 = vld [vmem:[#allocation5 + $0xa8] sm:$0xff]
    %v69 = vld [vmem:[#allocation5 + $0xb0] sm:$0xff]
    %v70 = vld [vmem:[#allocation5 + $0xb8] sm:$0xff]
    %v71 = vld [vmem:[%s2] sm:$0x1]
    %v73 = vperm.slane %v71, 0
    %vm75 = vcmask 523264
    %v77 = vsel %vm75, %v46, 0
    %79 = vmatpush.msra.mxu0 %v62
    %80 = vmatpush.msra.mxu0 %v61
    %81 = vmatpush.msra.mxu0 %v60
    %82 = vmatpush.msra.mxu0 %v59
    %83 = vmatpush.msra.mxu0 %v58
    %84 = vmatpush.msra.mxu0 %v57
    %85 = vmatpush.msra.mxu0 %v56
    %86 = vmatpush.msra.mxu0 %v55
    %87 = vmatpush.msra.mxu0 %v54
    %88 = vmatpush.msra.mxu0 %v53
    %89 = vmatpush.msra.mxu0 %v52
    %90 = vmatpush.msra.mxu0 %v51
    %91 = vmatpush.msra.mxu0 %v50
    %92 = vmatpush.msra.mxu0 %v49
    %93 = vmatpush.msra.mxu0 %v48
    %94 = vmatpush.msra.mxu0 %v47
    %95 = vmatmul.f32.gmra.mxu0 %v45
    %v96 = vpop.f32.mrf.mxu0
    %v97 = vadd.f32 %v73, %v96
    %98 = vdwg.mxu0
    %99 = vmatpush.msra.mxu0 0.0
    %100 = vmatpush.msra.mxu0 0.0
    %101 = vmatpush.msra.mxu0 0.0
    %102 = vmatpush.msra.mxu0 0.0
    %103 = vmatpush.msra.mxu0 0.0
    %104 = vmatpush.msra.mxu0 0.0
    %105 = vmatpush.msra.mxu0 0.0
    %106 = vmatpush.msra.mxu0 0.0
    %107 = vmatpush.msra.mxu0 %v70
    %108 = vmatpush.msra.mxu0 %v69
    %109 = vmatpush.msra.mxu0 %v68
    %110 = vmatpush.msra.mxu0 %v67
    %111 = vmatpush.msra.mxu0 %v66
    %112 = vmatpush.msra.mxu0 %v65
    %113 = vmatpush.msra.mxu0 %v64
    %114 = vmatpush.msra.mxu0 %v63
    %115 = vmatmul.f32.gmra.mxu0 %v77
    %v116 = vpop.f32.mrf.mxu0
    %v117 = vadd.f32 %v97, %v116
    %118 = vdwg.mxu0
    %119 = vst [vmem:[#allocation7] sm:$0xff] %v117
    // Predicated region
    $region22: #{tpu_custom_call.1} parent=1 // pred_check
      _
    $region23: #{tpu_custom_call.1} parent=1 // pred_check_branch
      %121 = sbr.rel (0) target = $region25
    $region24: #{tpu_custom_call.1} parent=1 // pred_region
      %123 = vsyncadd [#allocation4], 0
      %s125 = sshll.u32 [#allocation7], 4
      %s126 = int_to_ptr.vmem [resolvable:$true] %s125
      %s127 = sshll.u32 %s3, 4
      %s128 = int_to_ptr.hbm [resolvable:$true] %s127
      %130 = dma.vmem_to_hbm [thread:$0]  %s126, 128, %s128, [#allocation4]
    $region25: #{tpu_custom_call.1} parent=1 // pred_fallthru
      _
    // Predicated region
    $region26: #{tpu_custom_call.1} parent=1 // pred_check
      _
    $region27: #{tpu_custom_call.1} parent=1 // pred_check_branch
      %132 = sbr.rel (0) target = $region29
    $region28: #{tpu_custom_call.1} parent=1 // pred_region
      %134 = dma.done [#allocation4], 128
    $region29: #{tpu_custom_call.1} parent=1 // pred_fallthru
      _
    %135 = vsyncpa [#allocation3], 1
    %136 = vsyncpa [#allocation6], 1
    %137 = vsyncpa [#allocation4], 1

</llo_original>
